<compile_context>
chip_gen: v5e
topology: v5e:2x2
jax: 0.10.0
libtpu: 0.0.40
codegen_flags: <defaults>
</compile_context>

<pallas_src>
import functools

import jax
import jax.numpy as jnp
from jax.experimental import pallas as pl
from jax.experimental.pallas import tpu as pltpu


LANE = 128            # lane (last-dim / fan-out) alignment for dense stores + MXU width
SUBLANE_F32 = 8       # f32 sublane granularity (batch-dim tiling of x / out)
SUBLANE_BF16 = 16     # bf16 sublane granularity (contraction-dim padding)
MIN_PARALLEL_TB = 128 # don't split the batch below this per-tile size


def _round_up(x, m):
    return (x + m - 1) // m * m


# ----------------------------- Pallas kernel --------------------------------
def _mlp_fused_kernel(x_ref, *refs, num_layers: int):
    """Fused MLP on one (TB, In_pad) batch tile.

    refs = (w1, b1, w2, b2, ..., wL, bL, out).  Weights/biases are bf16 with all
    fan-out dims padded to 128 lanes; matmuls accumulate in f32 on the MXU.
    Intermediate activations never leave vregs/VMEM.
    """
    o_ref = refs[-1]
    wb = refs[:-1]

    h = x_ref[...].astype(jnp.bfloat16)                 # (TB, In_pad) bf16
    for i in range(num_layers):
        w = wb[2 * i][...]                              # (K_pad_i, N_pad_i) bf16
        b = wb[2 * i + 1][...]                          # (1, N_pad_i) bf16
        acc = jnp.dot(h, w, preferred_element_type=jnp.float32)   # f32 accum
        acc = acc + b.astype(jnp.float32)
        if i < num_layers - 1:                          # ReLU on hidden layers only
            h = jnp.maximum(acc, 0.0).astype(jnp.bfloat16)
        else:
            h = acc
    o_ref[...] = h.astype(o_ref.dtype)


# ------------------------------ Param handling --------------------------------
def init_mlp_params(key, embedding_size, hidden_sizes, output_size):
    """Deterministic init mirroring nn.Linear's U(-1/sqrt(fan_in), 1/sqrt(fan_in)).

    Weights stored as (in_features, out_features) so the kernel does y = x @ W + b.
    """
    sizes = [embedding_size] + list(hidden_sizes) + [output_size]
    params = []
    for fan_in, fan_out in zip(sizes[:-1], sizes[1:]):
        key, kw, kb = jax.random.split(key, 3)
        bound = 1.0 / (fan_in ** 0.5)
        w = jax.random.uniform(kw, (fan_in, fan_out), jnp.float32, -bound, bound)
        b = jax.random.uniform(kb, (fan_out,), jnp.float32, -bound, bound)
        params.append((w, b))
    return params


def pad_mlp_params(params, *, lane=LANE, k_sublane=SUBLANE_BF16, dtype=jnp.bfloat16):
    """Cast params to bf16 and zero-pad once at setup.

    Fan-out (lane) dims -> multiples of 128.  The first layer's fan-in is a pure
    contraction dim and only needs sublane alignment (16 for bf16); later layers'
    fan-in must match the previous layer's padded fan-out.  Padding is exact
    (contributes only zeros).
    """
    padded = []
    prev_out_pad = None
    for idx, (w, b) in enumerate(params):
        fi, fo = w.shape
        if idx == 0:
            fip = _round_up(fi, k_sublane)
        else:
            fip = prev_out_pad
            assert fip >= fi
        fop = _round_up(fo, lane)
        wp = jnp.zeros((fip, fop), dtype).at[:fi, :fo].set(w.astype(dtype))
        bp = jnp.zeros((1, fop), dtype).at[0, :fo].set(b.astype(dtype))
        padded.append((wp, bp))
        prev_out_pad = fop
    return padded


# ------------------------------- Fused forward --------------------------------
def mlp_forward_fused(padded_params, x, output_size, *, block_batch=256):
    """x: (B, In) f32 -> (B, output_size) f32 via one fused pallas_call."""
    B, In = x.shape
    num_layers = len(padded_params)
    In_pad = padded_params[0][0].shape[0]
    Out_pad = padded_params[-1][0].shape[1]

    # Batch tile: sublane-aligned, capped at block_batch; aim for >=2 tiles
    # (both v7x TensorCores busy) when each tile can stay >= MIN_PARALLEL_TB.
    B_sub = _round_up(B, SUBLANE_F32)
    if B_sub > block_batch:
        TB = block_batch
    elif B_sub >= 2 * MIN_PARALLEL_TB:
        TB = _round_up(-(-B_sub // 2), SUBLANE_F32)
    else:
        TB = B_sub
    B_pad = _round_up(B_sub, TB)

    if (B_pad, In_pad) != (B, In):
        # Only hit for ragged batches or a non-sublane-aligned embedding dim;
        # the demo shapes take the zero-copy passthrough below.
        x_p = jnp.zeros((B_pad, In_pad), x.dtype).at[:B, :In].set(x)
    else:
        x_p = x

    # Activation tile streams over the batch grid; weights/biases stay resident
    # in VMEM across batch tiles (constant index_map).
    in_specs = [pl.BlockSpec((TB, In_pad), lambda i: (i, 0))]
    flat_wb = []
    weight_bytes = 0
    for w, b in padded_params:
        flat_wb += [w, b]
        in_specs.append(pl.BlockSpec(w.shape, lambda i: (0, 0)))
        in_specs.append(pl.BlockSpec(b.shape, lambda i: (0, 0)))
        weight_bytes += w.size * w.dtype.itemsize + b.size * b.dtype.itemsize

    # VMEM budget: double-buffered x/out tiles + (implicitly double-buffered)
    # resident weights, with headroom.  Kept >= defaults, capped below v7x's
    # 64 MiB physical VMEM.
    act_bytes = TB * (In_pad * x_p.dtype.itemsize + Out_pad * 4)
    vmem_need = 2 * weight_bytes + 2 * act_bytes
    vmem_limit = int(min(max(2 * vmem_need + (4 << 20), 32 << 20), 48 << 20))

    flops = 2 * B_pad * sum(w.shape[0] * w.shape[1] for w, _ in padded_params)
    bytes_accessed = (x_p.size * x_p.dtype.itemsize
                      + weight_bytes
                      + B_pad * Out_pad * 4)
    cost = pl.CostEstimate(flops=flops, transcendentals=0,
                           bytes_accessed=bytes_accessed)

    out_padded = pl.pallas_call(
        functools.partial(_mlp_fused_kernel, num_layers=num_layers),
        out_shape=jax.ShapeDtypeStruct((B_pad, Out_pad), jnp.float32),
        grid_spec=pltpu.PrefetchScalarGridSpec(
            num_scalar_prefetch=0,
            grid=(B_pad // TB,),
            in_specs=in_specs,
            out_specs=pl.BlockSpec((TB, Out_pad), lambda i: (i, 0)),
        ),
        compiler_params=pltpu.CompilerParams(
            dimension_semantics=("parallel",),   # shard batch tiles across TCs
            vmem_limit_bytes=vmem_limit,
        ),
        cost_estimate=cost,
    )(x_p, *flat_wb)

    # Single narrow slice at the very end (only place true output_size appears).
    return out_padded[:B, :output_size]


# ------------------------------- References ------------------------------------
def mlp_reference_f32(params, x):
    """Pure-JAX f32 reference (unpadded)."""
    n = len(params)
    for i, (w, b) in enumerate(params):
        x = x @ w + b
        if i < n - 1:
            x = jnp.maximum(x, 0.0)
    return x


def mlp_reference_bf16(params, x):
    """Pure-JAX reference with the same bf16-input / f32-accumulate recipe."""
    n = len(params)
    h = x.astype(jnp.bfloat16)
    for i, (w, b) in enumerate(params):
        acc = jnp.dot(h, w.astype(jnp.bfloat16),
                      preferred_element_type=jnp.float32)
        acc = acc + b.astype(jnp.bfloat16).astype(jnp.float32)
        if i < n - 1:
            h = jnp.maximum(acc, 0.0).astype(jnp.bfloat16)
        else:
            h = acc
    return h


# --------------------------------- main ----------------------------------------
if __name__ == "__main__":
    embedding_size = 32
    hidden_sizes = [64, 32]
    output_size = 8
    batch = 8

    key = jax.random.PRNGKey(0)
    key, kx = jax.random.split(key)
    x = jax.random.normal(kx, (batch, embedding_size), jnp.float32)

    params = init_mlp_params(key, embedding_size, hidden_sizes, output_size)
    padded_params = pad_mlp_params(params)

    out = jax.block_until_ready(
        mlp_forward_fused(padded_params, x, output_size)
    )
    ref_bf16 = jax.block_until_ready(mlp_reference_bf16(params, x))
    ref_f32 = jax.block_until_ready(mlp_reference_f32(params, x))

    assert out.shape == (batch, output_size), out.shape
    # Primary check: matched bf16-input / f32-accumulation reference.
    assert jnp.allclose(out, ref_bf16, atol=1e-2, rtol=1e-2), "mismatch vs bf16 reference"
    # Sanity check against the full-f32 reference (bf16 rounding only).
    assert jnp.allclose(out, ref_f32, atol=5e-2, rtol=5e-2), "mismatch vs f32 reference"

    print("KERNEL_OK")
</pallas_src>

<mosaic_0001>
module attributes {stable_mosaic.version = 11 : i64} {
  func.func @_mlp_fused_kernel(%arg0: i32, %arg1: memref<8x32xf32, #tpu.memory_space<vmem>>, %arg2: memref<32x128xbf16, #tpu.memory_space<vmem>>, %arg3: memref<1x128xbf16, #tpu.memory_space<vmem>>, %arg4: memref<128x128xbf16, #tpu.memory_space<vmem>>, %arg5: memref<1x128xbf16, #tpu.memory_space<vmem>>, %arg6: memref<128x128xbf16, #tpu.memory_space<vmem>>, %arg7: memref<1x128xbf16, #tpu.memory_space<vmem>>, %arg8: memref<8x128xf32, #tpu.memory_space<vmem>>) attributes {dimension_semantics = [#tpu.dimension_semantics<parallel>], iteration_bounds = array<i64: 1>, scalar_prefetch = 0 : i64, scratch_operands = 0 : i64, tpu.core_type = #tpu.core_type<tc>, window_params = [{transform_indices = @transform_0, window_bounds = array<i64: 8, 32>}, {pipeline_mode = #tpu.pipeline_mode<synchronous>, transform_indices = @transform_1, window_bounds = array<i64: 32, 128>}, {pipeline_mode = #tpu.pipeline_mode<synchronous>, transform_indices = @transform_2, window_bounds = array<i64: 1, 128>}, {pipeline_mode = #tpu.pipeline_mode<synchronous>, transform_indices = @transform_3, window_bounds = array<i64: 128, 128>}, {pipeline_mode = #tpu.pipeline_mode<synchronous>, transform_indices = @transform_4, window_bounds = array<i64: 1, 128>}, {pipeline_mode = #tpu.pipeline_mode<synchronous>, transform_indices = @transform_5, window_bounds = array<i64: 128, 128>}, {pipeline_mode = #tpu.pipeline_mode<synchronous>, transform_indices = @transform_6, window_bounds = array<i64: 1, 128>}, {transform_indices = @transform_7, window_bounds = array<i64: 8, 128>}]} {
    %c0 = arith.constant 0 : index
    %c0_0 = arith.constant 0 : index
    %0 = vector.load %arg1[%c0, %c0_0] : memref<8x32xf32, #tpu.memory_space<vmem>>, vector<8x32xf32>
    %1 = arith.truncf %0 : vector<8x32xf32> to vector<8x32xbf16>
    %c0_1 = arith.constant 0 : index
    %c0_2 = arith.constant 0 : index
    %2 = vector.load %arg2[%c0_1, %c0_2] : memref<32x128xbf16, #tpu.memory_space<vmem>>, vector<32x128xbf16>
    %c0_3 = arith.constant 0 : index
    %c0_4 = arith.constant 0 : index
    %3 = vector.load %arg3[%c0_3, %c0_4] : memref<1x128xbf16, #tpu.memory_space<vmem>>, vector<1x128xbf16>
    %cst = arith.constant dense<0.000000e+00> : vector<8x128xf32>
    %4 = tpu.matmul %1, %2, %cst {dimension_numbers = #tpu.dot_dimension_numbers<[1], [0], [0], [1], [0, 0, 1, 1], [], []>} : vector<8x32xbf16>, vector<32x128xbf16>, vector<8x128xf32> -> vector<8x128xf32>
    %5 = arith.extf %3 : vector<1x128xbf16> to vector<1x128xf32>
    %6 = vector.broadcast %5 : vector<1x128xf32> to vector<8x128xf32>
    %7 = arith.addf %4, %6 : vector<8x128xf32>
    %cst_5 = arith.constant 0.000000e+00 : f32
    %8 = vector.broadcast %cst_5 : f32 to vector<8x128xf32>
    %9 = arith.maximumf %7, %8 : vector<8x128xf32>
    %10 = arith.truncf %9 : vector<8x128xf32> to vector<8x128xbf16>
    %c0_6 = arith.constant 0 : index
    %c0_7 = arith.constant 0 : index
    %11 = vector.load %arg4[%c0_6, %c0_7] : memref<128x128xbf16, #tpu.memory_space<vmem>>, vector<128x128xbf16>
    %c0_8 = arith.constant 0 : index
    %c0_9 = arith.constant 0 : index
    %12 = vector.load %arg5[%c0_8, %c0_9] : memref<1x128xbf16, #tpu.memory_space<vmem>>, vector<1x128xbf16>
    %cst_10 = arith.constant dense<0.000000e+00> : vector<8x128xf32>
    %13 = tpu.matmul %10, %11, %cst_10 {dimension_numbers = #tpu.dot_dimension_numbers<[1], [0], [0], [1], [0, 0, 1, 1], [], []>} : vector<8x128xbf16>, vector<128x128xbf16>, vector<8x128xf32> -> vector<8x128xf32>
    %14 = arith.extf %12 : vector<1x128xbf16> to vector<1x128xf32>
    %15 = vector.broadcast %14 : vector<1x128xf32> to vector<8x128xf32>
    %16 = arith.addf %13, %15 : vector<8x128xf32>
    %cst_11 = arith.constant 0.000000e+00 : f32
    %17 = vector.broadcast %cst_11 : f32 to vector<8x128xf32>
    %18 = arith.maximumf %16, %17 : vector<8x128xf32>
    %19 = arith.truncf %18 : vector<8x128xf32> to vector<8x128xbf16>
    %c0_12 = arith.constant 0 : index
    %c0_13 = arith.constant 0 : index
    %20 = vector.load %arg6[%c0_12, %c0_13] : memref<128x128xbf16, #tpu.memory_space<vmem>>, vector<128x128xbf16>
    %c0_14 = arith.constant 0 : index
    %c0_15 = arith.constant 0 : index
    %21 = vector.load %arg7[%c0_14, %c0_15] : memref<1x128xbf16, #tpu.memory_space<vmem>>, vector<1x128xbf16>
    %cst_16 = arith.constant dense<0.000000e+00> : vector<8x128xf32>
    %22 = tpu.matmul %19, %20, %cst_16 {dimension_numbers = #tpu.dot_dimension_numbers<[1], [0], [0], [1], [0, 0, 1, 1], [], []>} : vector<8x128xbf16>, vector<128x128xbf16>, vector<8x128xf32> -> vector<8x128xf32>
    %23 = arith.extf %21 : vector<1x128xbf16> to vector<1x128xf32>
    %24 = vector.broadcast %23 : vector<1x128xf32> to vector<8x128xf32>
    %25 = arith.addf %22, %24 : vector<8x128xf32>
    %c0_17 = arith.constant 0 : index
    %c0_18 = arith.constant 0 : index
    %26 = vector.load %arg8[%c0_17, %c0_18] : memref<8x128xf32, #tpu.memory_space<vmem>>, vector<8x128xf32>
    tpu.vector_store %arg8[%c0_17, %c0_18], %25 {strides = array<i32>} : memref<8x128xf32, #tpu.memory_space<vmem>>, vector<8x128xf32>,
    return
  }
  func.func @transform_0(%arg0: i32) -> (i32, i32) {
    %c0_i32 = arith.constant 0 : i32
    %c0_i32_0 = arith.constant 0 : i32
    return %arg0, %c0_i32 : i32, i32
  }
  func.func @transform_1(%arg0: i32) -> (i32, i32) {
    %c0_i32 = arith.constant 0 : i32
    %c0_i32_0 = arith.constant 0 : i32
    %c0_i32_1 = arith.constant 0 : i32
    return %c0_i32, %c0_i32_0 : i32, i32
  }
  func.func @transform_2(%arg0: i32) -> (i32, i32) {
    %c0_i32 = arith.constant 0 : i32
    %c0_i32_0 = arith.constant 0 : i32
    %c0_i32_1 = arith.constant 0 : i32
    return %c0_i32, %c0_i32_0 : i32, i32
  }
  func.func @transform_3(%arg0: i32) -> (i32, i32) {
    %c0_i32 = arith.constant 0 : i32
    %c0_i32_0 = arith.constant 0 : i32
    %c0_i32_1 = arith.constant 0 : i32
    return %c0_i32, %c0_i32_0 : i32, i32
  }
  func.func @transform_4(%arg0: i32) -> (i32, i32) {
    %c0_i32 = arith.constant 0 : i32
    %c0_i32_0 = arith.constant 0 : i32
    %c0_i32_1 = arith.constant 0 : i32
    return %c0_i32, %c0_i32_0 : i32, i32
  }
  func.func @transform_5(%arg0: i32) -> (i32, i32) {
    %c0_i32 = arith.constant 0 : i32
    %c0_i32_0 = arith.constant 0 : i32
    %c0_i32_1 = arith.constant 0 : i32
    return %c0_i32, %c0_i32_0 : i32, i32
  }
  func.func @transform_6(%arg0: i32) -> (i32, i32) {
    %c0_i32 = arith.constant 0 : i32
    %c0_i32_0 = arith.constant 0 : i32
    %c0_i32_1 = arith.constant 0 : i32
    return %c0_i32, %c0_i32_0 : i32, i32
  }
  func.func @transform_7(%arg0: i32) -> (i32, i32) {
    %c0_i32 = arith.constant 0 : i32
    %c0_i32_0 = arith.constant 0 : i32
    return %arg0, %c0_i32 : i32, i32
  }
}

</mosaic_0001>

<llo_original>
// kernel: tpu_custom_call.1
$region0: #{tpu_custom_call.1}
  #allocation0 [shape = 'u32[]', space=smem, size = 0x4, offset = 0x4, fixed_abs, tag = 'smem constant byte address 0x4 - core index']
  #allocation1 [shape = 'u32[72,128]{1,0:T(1,128)}', space=vmem, size = 0x9000, scoped, tag = 'internal scratch']
  %s0 = inlined_call_operand.hbm [shape: f32[8,32], index: 0, kind: input, shape index: {}]
  %s1 = inlined_call_operand.hbm [shape: bf16[32,128], index: 1, kind: input, shape index: {}]
  %s2 = inlined_call_operand.vmem [shape: bf16[1,128], index: 2, kind: input, shape index: {}]
  %s3 = inlined_call_operand.hbm [shape: bf16[128,128], index: 3, kind: input, shape index: {}]
  %s4 = inlined_call_operand.vmem [shape: bf16[1,128], index: 4, kind: input, shape index: {}]
  %s5 = inlined_call_operand.hbm [shape: bf16[128,128], index: 5, kind: input, shape index: {}]
  %s6 = inlined_call_operand.vmem [shape: bf16[1,128], index: 6, kind: input, shape index: {}]
  %s7 = inlined_call_operand.hbm [shape: f32[8,128], index: 7, kind: output, shape index: {}]
  %s8 = sld [smem:[#allocation0]]
  $region54: #{tpu_custom_call.1} parent=0
    _
  %s10 = ssub.s32 1, %s8
  %s11 = scalar_select 0, %s10, %s8
  $region1: #{tpu_custom_call.1} parent=0
    #allocation2 [shape = 'u8[4096]{0}', space=vmem, size = 0x1000, scoped, tag = 'input window, operand 0, single buffered']
    #allocation3 [shape = 's32[1]{0}', space=sflag, size = 0x4, scoped, tag = 'scoped memory for tpu_custom_call.1']
    #allocation4 [shape = 's32[1]{0}', space=sflag, size = 0x4, scoped, tag = 'scoped memory for tpu_custom_call.1']
    #allocation5 [shape = 'u8[8192]{0}', space=vmem, size = 0x2000, scoped, tag = 'input window, operand 1, single buffered']
    #allocation6 [shape = 's32[1]{0}', space=sflag, size = 0x4, scoped, tag = 'scoped memory for tpu_custom_call.1']
    #allocation7 [shape = 'u8[32768]{0}', space=vmem, size = 0x8000, scoped, tag = 'input window, operand 3, single buffered']
    #allocation8 [shape = 'u8[32768]{0}', space=vmem, size = 0x8000, scoped, tag = 'input window, operand 5, single buffered']
    #allocation9 [shape = 's32[1]{0}', space=sflag, size = 0x4, scoped, tag = 'scoped memory for tpu_custom_call.1']
    #allocation10 [shape = 'u8[4096]{0}', space=vmem, size = 0x1000, scoped, tag = 'output window, operand 0, single buffered']
    %12 = vsyncpa [#allocation3], 0
    %13 = vsyncpa [#allocation6], 0
    %14 = vsyncpa [#allocation9], 0
    %15 = vsyncpa [#allocation4], 0
    // Predicated region
    $region2: #{tpu_custom_call.1} parent=1 // pred_check
      _
    $region3: #{tpu_custom_call.1} parent=1 // pred_check_branch
      %17 = sbr.rel (0) target = $region5
    $region4: #{tpu_custom_call.1} parent=1 // pred_region
      %19 = vsyncadd [#allocation3], 0
      %s21 = sshll.u32 %s0, 4
      %s22 = int_to_ptr.hbm [resolvable:$true] %s21
      %s23 = sshll.u32 [#allocation2], 4
      %s24 = int_to_ptr.vmem [resolvable:$true] %s23
      %26 = dma.hbm_to_vmem [thread:$0]  %s22, 128, %s24, [#allocation3]
    $region5: #{tpu_custom_call.1} parent=1 // pred_fallthru
      _
    // Predicated region
    $region6: #{tpu_custom_call.1} parent=1 // pred_check
      _
    $region7: #{tpu_custom_call.1} parent=1 // pred_check_branch
      %28 = sbr.rel (0) target = $region9
    $region8: #{tpu_custom_call.1} parent=1 // pred_region
      %30 = vsyncadd [#allocation6], 0
      %s31 = sshll.u32 %s1, 4
      %s32 = int_to_ptr.hbm [resolvable:$true] %s31
      %s33 = sshll.u32 [#allocation5], 4
      %s34 = int_to_ptr.vmem [resolvable:$true] %s33
      %39 = dma.hbm_to_vmem [thread:$0]  %s32, 256, %s34, [#allocation6], 64, 64, 4
    $region9: #{tpu_custom_call.1} parent=1 // pred_fallthru
      _
    // Predicated region
    $region10: #{tpu_custom_call.1} parent=1 // pred_check
      _
    $region11: #{tpu_custom_call.1} parent=1 // pred_check_branch
      %41 = sbr.rel (0) target = $region13
    $region12: #{tpu_custom_call.1} parent=1 // pred_region
      _
    $region13: #{tpu_custom_call.1} parent=1 // pred_fallthru
      _
    // Predicated region
    $region14: #{tpu_custom_call.1} parent=1 // pred_check
      _
    $region15: #{tpu_custom_call.1} parent=1 // pred_check_branch
      %43 = sbr.rel (0) target = $region17
    $region16: #{tpu_custom_call.1} parent=1 // pred_region
      %45 = vsyncadd [#allocation6], 0
      %s46 = sshll.u32 %s3, 4
      %s47 = int_to_ptr.hbm [resolvable:$true] %s46
      %s48 = sshll.u32 [#allocation7], 4
      %s49 = int_to_ptr.vmem [resolvable:$true] %s48
      %54 = dma.hbm_to_vmem [thread:$0]  %s47, 1024, %s49, [#allocation6], 64, 64, 4
    $region17: #{tpu_custom_call.1} parent=1 // pred_fallthru
      _
    // Predicated region
    $region18: #{tpu_custom_call.1} parent=1 // pred_check
      _
    $region19: #{tpu_custom_call.1} parent=1 // pred_check_branch
      %56 = sbr.rel (0) target = $region21
    $region20: #{tpu_custom_call.1} parent=1 // pred_region
      _
    $region21: #{tpu_custom_call.1} parent=1 // pred_fallthru
      _
    // Predicated region
    $region22: #{tpu_custom_call.1} parent=1 // pred_check
      _
    $region23: #{tpu_custom_call.1} parent=1 // pred_check_branch
      %58 = sbr.rel (0) target = $region25
    $region24: #{tpu_custom_call.1} parent=1 // pred_region
      %60 = vsyncadd [#allocation9], 0
      %s61 = sshll.u32 %s5, 4
      %s62 = int_to_ptr.hbm [resolvable:$true] %s61
      %s63 = sshll.u32 [#allocation8], 4
      %s64 = int_to_ptr.vmem [resolvable:$true] %s63
      %69 = dma.hbm_to_vmem [thread:$0]  %s62, 1024, %s64, [#allocation9], 64, 64, 4
    $region25: #{tpu_custom_call.1} parent=1 // pred_fallthru
      _
    // Predicated region
    $region26: #{tpu_custom_call.1} parent=1 // pred_check
      _
    $region27: #{tpu_custom_call.1} parent=1 // pred_check_branch
      %71 = sbr.rel (0) target = $region29
    $region28: #{tpu_custom_call.1} parent=1 // pred_region
      _
    $region29: #{tpu_custom_call.1} parent=1 // pred_fallthru
      _
    // Predicated region
    $region30: #{tpu_custom_call.1} parent=1 // pred_check
      _
    $region31: #{tpu_custom_call.1} parent=1 // pred_check_branch
      %73 = sbr.rel (0) target = $region33
    $region32: #{tpu_custom_call.1} parent=1 // pred_region
      %75 = dma.done [#allocation3], 128
    $region33: #{tpu_custom_call.1} parent=1 // pred_fallthru
      _
    // Predicated region
    $region34: #{tpu_custom_call.1} parent=1 // pred_check
      _
    $region35: #{tpu_custom_call.1} parent=1 // pred_check_branch
      %77 = sbr.rel (0) target = $region37
    $region36: #{tpu_custom_call.1} parent=1 // pred_region
      %79 = dma.done [#allocation6], 256
    $region37: #{tpu_custom_call.1} parent=1 // pred_fallthru
      _
    // Predicated region
    $region38: #{tpu_custom_call.1} parent=1 // pred_check
      _
    $region39: #{tpu_custom_call.1} parent=1 // pred_check_branch
      %81 = sbr.rel (0) target = $region41
    $region40: #{tpu_custom_call.1} parent=1 // pred_region
      %83 = dma.done [#allocation6], 1024
    $region41: #{tpu_custom_call.1} parent=1 // pred_fallthru
      _
    // Predicated region
    $region42: #{tpu_custom_call.1} parent=1 // pred_check
      _
    $region43: #{tpu_custom_call.1} parent=1 // pred_check_branch
      %85 = sbr.rel (0) target = $region45
    $region44: #{tpu_custom_call.1} parent=1 // pred_region
      %87 = dma.done [#allocation9], 1024
    $region45: #{tpu_custom_call.1} parent=1 // pred_fallthru
      _
    %v89 = vld [vmem:[#allocation2] sm:$0xff]
    %v90 = vpack.c.bf16 %v89, %v89
    %v91 = vld [vmem:[#allocation5] sm:$0xf]
    %v92 = vld [vmem:[#allocation5 + $0x4] sm:$0xf]
    %v93 = vld [vmem:[#allocation5 + $0x8] sm:$0xf]
    %v94 = vld [vmem:[#allocation5 + $0xc] sm:$0xf]
    %v95 = vld [vmem:[%s2] sm:$0x1]
    %v96 = vunpack.c.l.bf16 %v95
    %v97 = vperm.slane %v96, 0
    %v102 = vunpack.c.l.b16 %v91
    %v103 = vunpack.c.l.b16 %v92
    %v104 = vunpack.c.l.b16 %v93
    %v105 = vunpack.c.l.b16 %v94
    %v106 = vpack.c.b16 %v103, %v102
    %v107 = vpack.c.b16 %v105, %v104
    %vm110 = vcmask 261120
    %v112 = vsel %vm110, %v90, 0
    %114 = vmatpush.bf16.msra.mxu0 0
    %115 = vmatpush.bf16.msra.mxu0 0
    %116 = vmatpush.bf16.msra.mxu0 0
    %117 = vmatpush.bf16.msra.mxu0 0
    %118 = vmatpush.bf16.msra.mxu0 0
    %119 = vmatpush.bf16.msra.mxu0 0
    %120 = vmatpush.bf16.msra.mxu0 %v107
    %121 = vmatpush.bf16.msra.mxu0 %v106
    %122 = vmatmul.bf16.gmra.mxu0 %v112
    %v123 = vpop.f32.mrf.mxu0
    %v124 = vadd.f32 %v97, %v123
    %v125 = vpop.f32.mrf.mxu0
    %126 = vdwg.mxu0
    %v127 = vmax.f32 %v124, 0.0
    %v128 = vpack.c.bf16 %v127, %v127
    %v129 = vld [vmem:[#allocation7] sm:$0xf]
    %v130 = vld [vmem:[#allocation7 + $0x4] sm:$0xf]
    %v131 = vld [vmem:[#allocation7 + $0x8] sm:$0xf]
    %v132 = vld [vmem:[#allocation7 + $0xc] sm:$0xf]
    %v133 = vld [vmem:[#allocation7 + $0x10] sm:$0xf]
    %v134 = vld [vmem:[#allocation7 + $0x14] sm:$0xf]
    %v135 = vld [vmem:[#allocation7 + $0x18] sm:$0xf]
    %v136 = vld [vmem:[#allocation7 + $0x1c] sm:$0xf]
    %v137 = vld [vmem:[#allocation7 + $0x20] sm:$0xf]
    %v138 = vld [vmem:[#allocation7 + $0x24] sm:$0xf]
    %v139 = vld [vmem:[#allocation7 + $0x28] sm:$0xf]
    %v140 = vld [vmem:[#allocation7 + $0x2c] sm:$0xf]
    %v141 = vld [vmem:[#allocation7 + $0x30] sm:$0xf]
    %v142 = vld [vmem:[#allocation7 + $0x34] sm:$0xf]
    %v143 = vld [vmem:[#allocation7 + $0x38] sm:$0xf]
    %v144 = vld [vmem:[#allocation7 + $0x3c] sm:$0xf]
    %v145 = vld [vmem:[%s4] sm:$0x1]
    %v146 = vunpack.c.l.bf16 %v145
    %v147 = vperm.slane %v146, 0
    %v164 = vunpack.c.l.b16 %v129
    %v165 = vunpack.c.l.b16 %v130
    %v166 = vunpack.c.l.b16 %v131
    %v167 = vunpack.c.l.b16 %v132
    %v168 = vunpack.c.l.b16 %v133
    %v169 = vunpack.c.l.b16 %v134
    %v170 = vunpack.c.l.b16 %v135
    %v171 = vunpack.c.l.b16 %v136
    %v172 = vunpack.c.l.b16 %v137
    %v173 = vunpack.c.l.b16 %v138
    %v174 = vunpack.c.l.b16 %v139
    %v175 = vunpack.c.l.b16 %v140
    %v176 = vunpack.c.l.b16 %v141
    %v177 = vunpack.c.l.b16 %v142
    %v178 = vunpack.c.l.b16 %v143
    %v179 = vunpack.c.l.b16 %v144
    %v180 = vpack.c.b16 %v165, %v164
    %v181 = vpack.c.b16 %v167, %v166
    %v182 = vpack.c.b16 %v169, %v168
    %v183 = vpack.c.b16 %v171, %v170
    %v184 = vpack.c.b16 %v173, %v172
    %v185 = vpack.c.b16 %v175, %v174
    %v186 = vpack.c.b16 %v177, %v176
    %v187 = vpack.c.b16 %v179, %v178
    %196 = vmatpush.bf16.msra.mxu0 %v187
    %197 = vmatpush.bf16.msra.mxu0 %v186
    %198 = vmatpush.bf16.msra.mxu0 %v185
    %199 = vmatpush.bf16.msra.mxu0 %v184
    %200 = vmatpush.bf16.msra.mxu0 %v183
    %201 = vmatpush.bf16.msra.mxu0 %v182
    %202 = vmatpush.bf16.msra.mxu0 %v181
    %203 = vmatpush.bf16.msra.mxu0 %v180
    %204 = vmatmul.bf16.gmra.mxu0 %v128
    %v205 = vpop.f32.mrf.mxu0
    %v206 = vadd.f32 %v147, %v205
    %v207 = vpop.f32.mrf.mxu0
    %208 = vdwg.mxu0
    %v209 = vmax.f32 %v206, 0.0
    %v210 = vpack.c.bf16 %v209, %v209
    %v211 = vld [vmem:[#allocation8] sm:$0xf]
    %v212 = vld [vmem:[#allocation8 + $0x4] sm:$0xf]
    %v213 = vld [vmem:[#allocation8 + $0x8] sm:$0xf]
    %v214 = vld [vmem:[#allocation8 + $0xc] sm:$0xf]
    %v215 = vld [vmem:[#allocation8 + $0x10] sm:$0xf]
    %v216 = vld [vmem:[#allocation8 + $0x14] sm:$0xf]
    %v217 = vld [vmem:[#allocation8 + $0x18] sm:$0xf]
    %v218 = vld [vmem:[#allocation8 + $0x1c] sm:$0xf]
    %v219 = vld [vmem:[#allocation8 + $0x20] sm:$0xf]
    %v220 = vld [vmem:[#allocation8 + $0x24] sm:$0xf]
    %v221 = vld [vmem:[#allocation8 + $0x28] sm:$0xf]
    %v222 = vld [vmem:[#allocation8 + $0x2c] sm:$0xf]
    %v223 = vld [vmem:[#allocation8 + $0x30] sm:$0xf]
    %v224 = vld [vmem:[#allocation8 + $0x34] sm:$0xf]
    %v225 = vld [vmem:[#allocation8 + $0x38] sm:$0xf]
    %v226 = vld [vmem:[#allocation8 + $0x3c] sm:$0xf]
    %v227 = vld [vmem:[%s6] sm:$0x1]
    %v228 = vunpack.c.l.bf16 %v227
    %v229 = vperm.slane %v228, 0
    %v246 = vunpack.c.l.b16 %v211
    %v247 = vunpack.c.l.b16 %v212
    %v248 = vunpack.c.l.b16 %v213
    %v249 = vunpack.c.l.b16 %v214
    %v250 = vunpack.c.l.b16 %v215
    %v251 = vunpack.c.l.b16 %v216
    %v252 = vunpack.c.l.b16 %v217
    %v253 = vunpack.c.l.b16 %v218
    %v254 = vunpack.c.l.b16 %v219
    %v255 = vunpack.c.l.b16 %v220
    %v256 = vunpack.c.l.b16 %v221
    %v257 = vunpack.c.l.b16 %v222
    %v258 = vunpack.c.l.b16 %v223
    %v259 = vunpack.c.l.b16 %v224
    %v260 = vunpack.c.l.b16 %v225
    %v261 = vunpack.c.l.b16 %v226
    %v262 = vpack.c.b16 %v247, %v246
    %v263 = vpack.c.b16 %v249, %v248
    %v264 = vpack.c.b16 %v251, %v250
    %v265 = vpack.c.b16 %v253, %v252
    %v266 = vpack.c.b16 %v255, %v254
    %v267 = vpack.c.b16 %v257, %v256
    %v268 = vpack.c.b16 %v259, %v258
    %v269 = vpack.c.b16 %v261, %v260
    %278 = vmatpush.bf16.msra.mxu0 %v269
    %279 = vmatpush.bf16.msra.mxu0 %v268
    %280 = vmatpush.bf16.msra.mxu0 %v267
    %281 = vmatpush.bf16.msra.mxu0 %v266
    %282 = vmatpush.bf16.msra.mxu0 %v265
    %283 = vmatpush.bf16.msra.mxu0 %v264
    %284 = vmatpush.bf16.msra.mxu0 %v263
    %285 = vmatpush.bf16.msra.mxu0 %v262
    %286 = vmatmul.bf16.gmra.mxu0 %v210
    %v287 = vpop.f32.mrf.mxu0
    %v288 = vadd.f32 %v229, %v287
    %v289 = vpop.f32.mrf.mxu0
    %290 = vdwg.mxu0
    %291 = vst [vmem:[#allocation10] sm:$0xff] %v288
    // Predicated region
    $region46: #{tpu_custom_call.1} parent=1 // pred_check
      _
    $region47: #{tpu_custom_call.1} parent=1 // pred_check_branch
      %293 = sbr.rel (0) target = $region49
    $region48: #{tpu_custom_call.1} parent=1 // pred_region
      %295 = vsyncadd [#allocation4], 0
      %s297 = sshll.u32 [#allocation10], 4
      %s298 = int_to_ptr.vmem [resolvable:$true] %s297
      %s299 = sshll.u32 %s7, 4
      %s300 = int_to_ptr.hbm [resolvable:$true] %s299
      %302 = dma.vmem_to_hbm [thread:$0]  %s298, 128, %s300, [#allocation4]
    $region49: #{tpu_custom_call.1} parent=1 // pred_fallthru
      _
    // Predicated region
    $region50: #{tpu_custom_call.1} parent=1 // pred_check
      _
    $region51: #{tpu_custom_call.1} parent=1 // pred_check_branch
      %304 = sbr.rel (0) target = $region53
    $region52: #{tpu_custom_call.1} parent=1 // pred_region
      %306 = dma.done [#allocation4], 128
    $region53: #{tpu_custom_call.1} parent=1 // pred_fallthru
      _
    %307 = vsyncpa [#allocation3], 1
    %308 = vsyncpa [#allocation6], 1
    %309 = vsyncpa [#allocation9], 1
    %310 = vsyncpa [#allocation4], 1

</llo_original>
